<compile_context>
chip_gen: v7x
topology: tpu7x:2x2x1
jax: 0.10.0
libtpu: 0.0.40
codegen_flags: <defaults>
</compile_context>

<pallas_src>
import functools

import jax
import jax.numpy as jnp
from jax.experimental import pallas as pl
from jax.experimental.pallas import tpu as pltpu

GAMMA = 1.5
ALPHA = 0.25
LANES = 128

_SINGLE_BLOCK_MAX_ROWS = 1024        # <= 512 KiB per f32 input -> single block
_TILE_M = 2048                       # 1 MiB f32 input tiles for streaming path
_NUM_SPLITS = 2                      # leading 'parallel' axis (v7x: 2 TCs)
_VMEM_LIMIT_BYTES = 40 * 1024 * 1024 # under v7x's 64 MiB physical VMEM


def _focal_elementwise(x_raw, y_raw):
    """Per-element focal loss: BCE-with-logits * alpha_factor * (1-p_t)^1.5."""
    x = x_raw.astype(jnp.float32)
    y = y_raw.astype(jnp.float32)

    # Shared transcendental: e = exp(-|x|) feeds both the stable BCE log term
    # and the sigmoid (single EUP slot is the contended resource).
    e = jnp.exp(-jnp.abs(x))

    # Numerically-stable BCE with logits (reduction='none').
    bce = jnp.maximum(x, 0.0) - x * y + jnp.log1p(e)

    # sigmoid(x): s = 1/(1+exp(-|x|)) == sigmoid(|x|); mirror for x < 0.
    # approx reciprocal -> EUP vrcp slot instead of a multi-op VPU divide.
    s = pl.reciprocal(1.0 + e, approx=True)
    p = jnp.where(x >= 0.0, s, 1.0 - s)

    # p_t = y*p + (1-y)*(1-p)  =>  1 - p_t = p + y - 2*p*y  (folded algebra).
    # Clamp at 0: rounding can make it slightly negative -> sqrt would NaN.
    one_minus_pt = jnp.maximum(p + y - 2.0 * p * y, 0.0)
    # gamma = 1.5 exactly: z**1.5 == z * sqrt(z)
    modulating = one_minus_pt * jnp.sqrt(one_minus_pt)

    # alpha_factor = y*ALPHA + (1-y)*(1-ALPHA) = (1-ALPHA) + (2*ALPHA-1)*y
    alpha_factor = (1.0 - ALPHA) + (2.0 * ALPHA - 1.0) * y

    return bce * alpha_factor * modulating


def _focal_single_block_kernel(pred_ref, true_ref, out_ref, *, inv_n):
    loss = _focal_elementwise(pred_ref[...], true_ref[...])
    # reduction == 'mean': multiply by precomputed 1/N (no hardware divide).
    out_ref[...] = jnp.sum(loss, keepdims=True) * inv_n


def _focal_tiled_kernel(pred_ref, true_ref, out_ref, *,
                        m, tile_m, bpc, need_mask):
    i = pl.program_id(1)

    @pl.when(i == 0)
    def _():
        out_ref[...] = jnp.zeros_like(out_ref)

    loss = _focal_elementwise(pred_ref[...], true_ref[...])

    if need_mask:
        # Zero rows beyond the real row count (partial last tile and any
        # fully-padded block of the 2-way core split).
        c = pl.program_id(0)
        row0 = (c * bpc + i) * tile_m
        rows = row0 + jax.lax.broadcasted_iota(jnp.int32, (tile_m, LANES), 0)
        loss = jnp.where(rows < m, loss, 0.0)

    # Partial-reduce the tile to one (8,128) vreg: pure cross-vreg VALU adds
    # (leading-dim split of the row axis -> no lane/sublane relayout). The
    # output block is resident across the 'arbitrary' axis and acts as the
    # accumulator; the final (8,128)->scalar reduce happens in the wrapper.
    partial = loss.reshape(tile_m // 8, 8, LANES).sum(axis=0)
    out_ref[...] += partial[None, :, :]


def focal_loss(pred, true):
    """pred, true: float arrays of identical shape. Returns scalar f32 (mean)."""
    assert pred.shape == true.shape
    n_total = pred.size
    inv_n = 1.0 / float(n_total)

    pred_flat = pred.reshape(-1)
    true_flat = true.reshape(-1)
    rem = n_total % LANES
    if rem:
        # Pad with "neutral" elements: logit=+40, target=1 -> focal loss == 0,
        # so they don't perturb the sum; the mean still divides by n_total.
        pad = LANES - rem
        pred_flat = jnp.pad(pred_flat, (0, pad), constant_values=40.0)
        true_flat = jnp.pad(true_flat, (0, pad), constant_values=1.0)

    m = pred_flat.size // LANES
    pred2d = pred_flat.reshape(m, LANES)
    true2d = true_flat.reshape(m, LANES)

    if m <= _SINGLE_BLOCK_MAX_ROWS:
        # Single full block: no grid, no scratch — one DMA-in/compute/DMA-out.
        out = pl.pallas_call(
            functools.partial(_focal_single_block_kernel, inv_n=inv_n),
            out_shape=jax.ShapeDtypeStruct((1, 1), jnp.float32),
        )(pred2d, true2d)
        return out[0, 0]

    # ---- Tiled streaming reduction for large inputs -------------------------
    tile_m = _TILE_M
    nblocks = -(-m // tile_m)                        # ceil div
    splits = _NUM_SPLITS if nblocks >= _NUM_SPLITS else 1
    bpc = -(-nblocks // splits)                      # blocks per core
    need_mask = (m % tile_m != 0) or (splits * bpc != nblocks)

    def in_map(c, i):
        # Clamp so padded steps of the core split never index past the array;
        # their contribution is zeroed by the in-kernel row mask.
        return (jnp.minimum(c * bpc + i, nblocks - 1), 0)

    partials = pl.pallas_call(
        functools.partial(_focal_tiled_kernel, m=m, tile_m=tile_m,
                          bpc=bpc, need_mask=need_mask),
        out_shape=jax.ShapeDtypeStruct((splits, 8, LANES), jnp.float32),
        grid_spec=pltpu.PrefetchScalarGridSpec(
            num_scalar_prefetch=0,
            grid=(splits, bpc),
            in_specs=[
                pl.BlockSpec((tile_m, LANES), in_map),
                pl.BlockSpec((tile_m, LANES), in_map),
            ],
            out_specs=pl.BlockSpec((1, 8, LANES), lambda c, i: (c, 0, 0)),
        ),
        compiler_params=pltpu.CompilerParams(
            dimension_semantics=("parallel", "arbitrary"),
            vmem_limit_bytes=_VMEM_LIMIT_BYTES,
        ),
    )(pred2d, true2d)

    # Tiny final reduce (splits*8*128 f32) + mean scaling in XLA.
    return jnp.sum(partials) * inv_n


def focal_loss_ref(pred, true):
    x = pred.astype(jnp.float32)
    y = true.astype(jnp.float32)
    bce = jnp.maximum(x, 0.0) - x * y + jnp.log1p(jnp.exp(-jnp.abs(x)))
    p = jax.nn.sigmoid(x)
    p_t = y * p + (1.0 - y) * (1.0 - p)
    af = y * ALPHA + (1.0 - y) * (1.0 - ALPHA)
    mf = (1.0 - p_t) ** GAMMA
    return jnp.mean(bce * af * mf)


if __name__ == "__main__":
    key = jax.random.PRNGKey(0)
    k1, k2, k3, k4, k5, k6 = jax.random.split(key, 6)

    # Tolerance is looser than 1e-5 because the sigmoid uses the EUP approx
    # reciprocal (pl.reciprocal(..., approx=True)); it only feeds the focal
    # modulating terms, not the BCE log term, so the error stays tiny.
    RTOL, ATOL = 5e-3, 1e-6

    # NCHW inputs, as in the PyTorch module's typical use (spec shape).
    shape = (2, 4, 16, 16)
    pred = jax.random.normal(k1, shape, dtype=jnp.float32) * 2.0
    true = jax.random.uniform(k2, shape, dtype=jnp.float32)
    out = focal_loss(pred, true)
    jax.block_until_ready(out)
    ref = focal_loss_ref(pred, true)
    assert jnp.allclose(out, ref, rtol=RTOL, atol=ATOL), (out, ref)

    # Tiled streaming path: 393216 elems -> 3072 rows -> 2 blocks of 2048 rows
    # (second one partially masked), split across the 2-way 'parallel' axis.
    big_shape = (8, 4, 96, 128)
    pred_b = jax.random.normal(k3, big_shape, dtype=jnp.float32) * 2.0
    true_b = jax.random.uniform(k4, big_shape, dtype=jnp.float32)
    out_b = focal_loss(pred_b, true_b)
    jax.block_until_ready(out_b)
    ref_b = focal_loss_ref(pred_b, true_b)
    assert jnp.allclose(out_b, ref_b, rtol=RTOL, atol=ATOL), (out_b, ref_b)

    # Awkward shape: element count not a multiple of 128 (exercises padding).
    odd_shape = (3, 5, 7, 11)
    pred_o = jax.random.normal(k5, odd_shape, dtype=jnp.float32) * 2.0
    true_o = jax.random.uniform(k6, odd_shape, dtype=jnp.float32)
    out_o = focal_loss(pred_o, true_o)
    jax.block_until_ready(out_o)
    ref_o = focal_loss_ref(pred_o, true_o)
    assert jnp.allclose(out_o, ref_o, rtol=RTOL, atol=ATOL), (out_o, ref_o)

    print("KERNEL_OK")
</pallas_src>

<mosaic_0001>
module attributes {stable_mosaic.version = 11 : i64} {
  func.func @_focal_single_block_kernel(%arg0: memref<16x128xf32, #tpu.memory_space<vmem>>, %arg1: memref<16x128xf32, #tpu.memory_space<vmem>>, %arg2: memref<1x1xf32, #tpu.memory_space<vmem>>) attributes {dimension_semantics = [], scalar_prefetch = 0 : i64, scratch_operands = 0 : i64, tpu.core_type = #tpu.core_type<tc>} {
    %c0 = arith.constant 0 : index
    %c0_0 = arith.constant 0 : index
    %0 = vector.load %arg0[%c0, %c0_0] : memref<16x128xf32, #tpu.memory_space<vmem>>, vector<16x128xf32>
    %c0_1 = arith.constant 0 : index
    %c0_2 = arith.constant 0 : index
    %1 = vector.load %arg1[%c0_1, %c0_2] : memref<16x128xf32, #tpu.memory_space<vmem>>, vector<16x128xf32>
    %2 = math.absf %0 : vector<16x128xf32>
    %cst = arith.constant 0.000000e+00 : f32
    %3 = vector.broadcast %cst : f32 to vector<16x128xf32>
    %4 = arith.subf %3, %2 : vector<16x128xf32>
    %5 = math.exp %4 : vector<16x128xf32>
    %cst_3 = arith.constant 0.000000e+00 : f32
    %6 = vector.broadcast %cst_3 : f32 to vector<16x128xf32>
    %7 = arith.maximumf %0, %6 : vector<16x128xf32>
    %8 = arith.mulf %0, %1 : vector<16x128xf32>
    %9 = arith.subf %7, %8 : vector<16x128xf32>
    %10 = math.log1p %5 : vector<16x128xf32>
    %11 = arith.addf %9, %10 : vector<16x128xf32>
    %cst_4 = arith.constant 1.000000e+00 : f32
    %12 = vector.broadcast %cst_4 : f32 to vector<16x128xf32>
    %13 = arith.addf %12, %5 : vector<16x128xf32>
    %14 = tpu.reciprocal %13 {approx = true} : vector<16x128xf32> -> vector<16x128xf32>
    %cst_5 = arith.constant 0.000000e+00 : f32
    %15 = vector.broadcast %cst_5 : f32 to vector<16x128xf32>
    %16 = arith.cmpf oge, %0, %15 : vector<16x128xf32>
    %cst_6 = arith.constant 1.000000e+00 : f32
    %17 = vector.broadcast %cst_6 : f32 to vector<16x128xf32>
    %18 = arith.subf %17, %14 : vector<16x128xf32>
    %19 = arith.select %16, %14, %18 : vector<16x128xi1>, vector<16x128xf32>
    %20 = arith.addf %19, %1 : vector<16x128xf32>
    %cst_7 = arith.constant 2.000000e+00 : f32
    %21 = vector.broadcast %cst_7 : f32 to vector<16x128xf32>
    %22 = arith.mulf %21, %19 : vector<16x128xf32>
    %23 = arith.mulf %22, %1 : vector<16x128xf32>
    %24 = arith.subf %20, %23 : vector<16x128xf32>
    %cst_8 = arith.constant 0.000000e+00 : f32
    %25 = vector.broadcast %cst_8 : f32 to vector<16x128xf32>
    %26 = arith.maximumf %24, %25 : vector<16x128xf32>
    %27 = math.sqrt %26 : vector<16x128xf32>
    %28 = arith.mulf %26, %27 : vector<16x128xf32>
    %cst_9 = arith.constant -5.000000e-01 : f32
    %29 = vector.broadcast %cst_9 : f32 to vector<16x128xf32>
    %30 = arith.mulf %29, %1 : vector<16x128xf32>
    %cst_10 = arith.constant 7.500000e-01 : f32
    %31 = vector.broadcast %cst_10 : f32 to vector<16x128xf32>
    %32 = arith.addf %31, %30 : vector<16x128xf32>
    %33 = arith.mulf %11, %32 : vector<16x128xf32>
    %34 = arith.mulf %33, %28 : vector<16x128xf32>
    %35 = vector.shape_cast %34 : vector<16x128xf32> to vector<1x16x128xf32>
    %cst_11 = arith.constant dense<0.000000e+00> : vector<1xf32>
    %36 = vector.multi_reduction <add>, %35, %cst_11 [1, 2] : vector<1x16x128xf32> to vector<1xf32>
    %37 = vector.shape_cast %36 : vector<1xf32> to vector<1x1x1xf32>
    %38 = vector.extract %37[0, 0, 0] : f32 from vector<1x1x1xf32>
    %39 = vector.broadcast %38 : f32 to vector<1x1xf32>
    %cst_12 = arith.constant 4.8828125E-4 : f32
    %40 = vector.broadcast %cst_12 : f32 to vector<1x1xf32>
    %41 = arith.mulf %39, %40 : vector<1x1xf32>
    %c0_13 = arith.constant 0 : index
    %c0_14 = arith.constant 0 : index
    %42 = vector.load %arg2[%c0_13, %c0_14] : memref<1x1xf32, #tpu.memory_space<vmem>>, vector<1x1xf32>
    tpu.vector_store %arg2[%c0_13, %c0_14], %41 {strides = array<i32>} : memref<1x1xf32, #tpu.memory_space<vmem>>, vector<1x1xf32>,
    return
  }
}

</mosaic_0001>

<llo_original>
// kernel: tpu_custom_call.1
$region0: #{tpu_custom_call.1}
  #allocation0 [shape = 'u32[]', space=smem, size = 0x4, offset = 0x4, fixed_abs, tag = 'smem constant byte address 0x4 - core index']
  #allocation1 [shape = 'u32[144,128]{1,0:T(1,128)}', space=vmem, size = 0x12000, scoped, tag = 'internal scratch']
  %s0 = inlined_call_operand.hbm [shape: f32[16,128], index: 0, kind: input, shape index: {}]
  %s1 = inlined_call_operand.hbm [shape: f32[16,128], index: 1, kind: input, shape index: {}]
  %s2 = inlined_call_operand.hbm [shape: f32[1,1], index: 2, kind: output, shape index: {}]
  %s3 = sld [smem:[#allocation0]]
  $region26: #{tpu_custom_call.1} parent=0
    _
  %s5 = ssub.s32 1, %s3
  %s6 = scalar_select 0, %s5, %s3
  $region1: #{tpu_custom_call.1} parent=0
    #allocation2 [shape = 'u8[8192]{0}', space=vmem, size = 0x2000, scoped, tag = 'input window, operand 0, single buffered']
    #allocation3 [shape = 's32[1]{0}', space=sflag, size = 0x4, scoped, tag = 'scoped memory for tpu_custom_call.1']
    #allocation4 [shape = 's32[1]{0}', space=sflag, size = 0x4, scoped, tag = 'scoped memory for tpu_custom_call.1']
    #allocation5 [shape = 'u8[8192]{0}', space=vmem, size = 0x2000, scoped, tag = 'input window, operand 1, single buffered']
    #allocation6 [shape = 's32[1]{0}', space=sflag, size = 0x4, scoped, tag = 'scoped memory for tpu_custom_call.1']
    #allocation7 [shape = 'u8[512]{0}', space=vmem, size = 0x400, scoped, tag = 'output window, operand 0, single buffered']
    %7 = vsyncpa [#allocation3], 0
    %8 = vsyncpa [#allocation6], 0
    %9 = vsyncpa [#allocation4], 0
    // Predicated region
    $region2: #{tpu_custom_call.1} parent=1 // pred_check
      _
    $region3: #{tpu_custom_call.1} parent=1 // pred_check_branch
      %11 = sbr.rel (0) target = $region5
    $region4: #{tpu_custom_call.1} parent=1 // pred_region
      %s13 = ssub.s32 256, 256
      %14 = vsyncadd [#allocation3], %s13
      %s15 = sshll.u32 [#allocation2], 4
      %s16 = int_to_ptr.vmem [resolvable:$true] %s15
      %21 = dma.hbm_to_vmem [thread:$0]  %s0, 256, %s16, [#allocation3], 128, 128, 8
    $region5: #{tpu_custom_call.1} parent=1 // pred_fallthru
      _
    // Predicated region
    $region6: #{tpu_custom_call.1} parent=1 // pred_check
      _
    $region7: #{tpu_custom_call.1} parent=1 // pred_check_branch
      %23 = sbr.rel (0) target = $region9
    $region8: #{tpu_custom_call.1} parent=1 // pred_region
      %s25 = ssub.s32 256, 256
      %26 = vsyncadd [#allocation6], %s25
      %s27 = sshll.u32 [#allocation5], 4
      %s28 = int_to_ptr.vmem [resolvable:$true] %s27
      %33 = dma.hbm_to_vmem [thread:$0]  %s1, 256, %s28, [#allocation6], 128, 128, 8
    $region9: #{tpu_custom_call.1} parent=1 // pred_fallthru
      _
    // Predicated region
    $region10: #{tpu_custom_call.1} parent=1 // pred_check
      _
    $region11: #{tpu_custom_call.1} parent=1 // pred_check_branch
      %35 = sbr.rel (0) target = $region13
    $region12: #{tpu_custom_call.1} parent=1 // pred_region
      %36 = dma.done [#allocation3], 256
    $region13: #{tpu_custom_call.1} parent=1 // pred_fallthru
      _
    // Predicated region
    $region14: #{tpu_custom_call.1} parent=1 // pred_check
      _
    $region15: #{tpu_custom_call.1} parent=1 // pred_check_branch
      %38 = sbr.rel (0) target = $region17
    $region16: #{tpu_custom_call.1} parent=1 // pred_region
      %39 = dma.done [#allocation6], 256
    $region17: #{tpu_custom_call.1} parent=1 // pred_fallthru
      _
    %v40 = vld [vmem:[#allocation2] sm:$0xff]
    %v41 = vld [vmem:[#allocation2 + $0x8] sm:$0xff]
    %v42 = vld [vmem:[#allocation5] sm:$0xff]
    %v43 = vld [vmem:[#allocation5 + $0x8] sm:$0xff]
    %v44 = vand.u32 2147483647, %v40
    %v45 = vand.u32 2147483647, %v41
    %v46 = vsub.f32 0.0, %v44
    %v47 = vsub.f32 0.0, %v45
    %v48 = vmul.f32 %v46, 1.442695
    %v49 = vpow.pop %v48
    %v50 = vmul.f32 %v47, 1.442695
    %v51 = vpow.pop %v50
    %v52 = vmax.f32 %v40, 0.0
    %v53 = vmax.f32 %v41, 0.0
    %v54 = vmul.f32 %v40, %v42
    %v55 = vmul.f32 %v41, %v43
    %v56 = vsub.f32 %v52, %v54
    %v57 = vsub.f32 %v53, %v55
    %v58 = vadd.f32 %v49, 1.0
    %v59 = vlog2.pop %v58
    %v60 = vmul.f32 %v59, 0.6931472
    %v61 = vmul.f32 -0.5, %v49
    %v62 = vadd.f32 %v61, 1.0
    %v63 = vmul.f32 %v62, %v49
    %v64 = vand.u32 2147483647, %v49
    %vm65 = vcmp.lt.f32.partialorder %v64, 0.0004427343
    %v66 = vsel %vm65, %v63, %v60
    %v67 = vadd.f32 %v51, 1.0
    %v68 = vlog2.pop %v67
    %v69 = vmul.f32 %v68, 0.6931472
    %v70 = vmul.f32 -0.5, %v51
    %v71 = vadd.f32 %v70, 1.0
    %v72 = vmul.f32 %v71, %v51
    %v73 = vand.u32 2147483647, %v51
    %vm74 = vcmp.lt.f32.partialorder %v73, 0.0004427343
    %v75 = vsel %vm74, %v72, %v69
    %v76 = vadd.f32 %v56, %v66
    %v77 = vadd.f32 %v57, %v75
    %v78 = vadd.f32 %v49, 1.0
    %v79 = vadd.f32 %v51, 1.0
    %v80 = vrcp.pop %v78
    %v81 = vrcp.pop %v79
    %vm82 = vcmp.ge.f32.partialorder %v40, 0.0
    %vm83 = vcmp.ge.f32.partialorder %v41, 0.0
    %v84 = vsub.f32 1.0, %v80
    %v85 = vsub.f32 1.0, %v81
    %v86 = vsel %vm82, %v80, %v84
    %v87 = vsel %vm83, %v81, %v85
    %v88 = vadd.f32 %v86, %v42
    %v89 = vadd.f32 %v87, %v43
    %v90 = vmul.f32 %v86, 2.0
    %v91 = vmul.f32 %v87, 2.0
    %v92 = vmul.f32 %v90, %v42
    %v93 = vmul.f32 %v91, %v43
    %v94 = vsub.f32 %v88, %v92
    %v95 = vsub.f32 %v89, %v93
    %v96 = vmax.f32 %v94, 0.0
    %v97 = vmax.f32 %v95, 0.0
    %v98 = vrsqrt.pop %v96
    %v99 = vmul.f32 %v96, %v98
    %vm100 = vcmp.eq.f32.partialorder %v96, inf
    %v101 = vsel %vm100, %v96, %v99
    %vm102 = vcmp.eq.f32.partialorder %v96, 0.0
    %v103 = vand.u32 %v96, 2147483648
    %v104 = vsel %vm102, %v103, %v101
    %v105 = vrsqrt.pop %v97
    %v106 = vmul.f32 %v97, %v105
    %vm107 = vcmp.eq.f32.partialorder %v97, inf
    %v108 = vsel %vm107, %v97, %v106
    %vm109 = vcmp.eq.f32.partialorder %v97, 0.0
    %v110 = vand.u32 %v97, 2147483648
    %v111 = vsel %vm109, %v110, %v108
    %v112 = vmul.f32 %v96, %v104
    %v113 = vmul.f32 %v97, %v111
    %v114 = vmul.f32 %v42, -0.5
    %v115 = vmul.f32 %v43, -0.5
    %v116 = vadd.f32 %v114, 0.75
    %v117 = vadd.f32 %v115, 0.75
    %v118 = vmul.f32 %v76, %v116
    %v119 = vmul.f32 %v77, %v117
    %v120 = vmul.f32 %v118, %v112
    %v121 = vmul.f32 %v119, %v113
    %v122 = vadd.f32 %v120, %v121
    %123 = vadd.xlane.f32.xlu0 %v122
    %v124 = vpop.xlane.xlu0 %123
    %v125 = vrot.slane %v124, 4
    %v126 = vadd.f32 %v124, %v125
    %v127 = vrot.slane %v126, 2
    %v128 = vadd.f32 %v126, %v127
    %v129 = vrot.slane %v128, 1
    %v130 = vadd.f32 %v128, %v129
    %s131 = vtos %v130
    %v132 = vstv %s131
    %v133 = vmul.f32 %v132, 0.00048828125
    %vm134 = vcmask 0
    %135 = vst.msk [vmem:[#allocation7] sm:$0x1] %vm134, %v133
    // Predicated region
    $region18: #{tpu_custom_call.1} parent=1 // pred_check
      _
    $region19: #{tpu_custom_call.1} parent=1 // pred_check_branch
      %137 = sbr.rel (0) target = $region21
    $region20: #{tpu_custom_call.1} parent=1 // pred_region
      %s139 = ssub.s32 16, 16
      %140 = vsyncadd [#allocation4], %s139
      %s142 = sshll.u32 [#allocation7], 4
      %s143 = int_to_ptr.vmem [resolvable:$true] %s142
      %145 = dma.vmem_to_hbm [thread:$0]  %s143, 16, %s2, [#allocation4]
    $region21: #{tpu_custom_call.1} parent=1 // pred_fallthru
      _
    // Predicated region
    $region22: #{tpu_custom_call.1} parent=1 // pred_check
      _
    $region23: #{tpu_custom_call.1} parent=1 // pred_check_branch
      %147 = sbr.rel (0) target = $region25
    $region24: #{tpu_custom_call.1} parent=1 // pred_region
      %148 = dma.done [#allocation4], 16
    $region25: #{tpu_custom_call.1} parent=1 // pred_fallthru
      _
    %149 = vsyncpa [#allocation3], 1
    %150 = vsyncpa [#allocation6], 1
    %151 = vsyncpa [#allocation4], 1

</llo_original>
